<compile_context>
chip_gen: v7x
topology: tpu7x:2x2x1
jax: 0.10.0
libtpu: 0.0.40
codegen_flags: <defaults>
</compile_context>

<pallas_src>
import math

import jax
import jax.numpy as jnp
from jax import lax
from jax.experimental import pallas as pl
from jax.experimental.pallas import tpu as pltpu


def _fudft_kernel(t_ref, row2_ref, off_ref, scale_ref, x_ref, out_ref):
    # t_ref:     (Bt, N, 1)   f32   t[b, j] * (N - 1)
    # row2_ref:  (1, 1, St)   f32   -2*pi*freqs*(N-1)/N   (cos half | sin half)
    # off_ref:   (1, 1, St)   f32   0 (cos half) | -pi/2 (sin half)
    # scale_ref: (1, 1, St)   f32   1/sqrt(N), zeroed at removed components
    # x_ref:     (Bt, C, N)   f32   x transposed (channels-major)
    # out_ref:   (Bt, C, St)  f32
    theta = t_ref[...] * row2_ref[...] + off_ref[...]          # (Bt, N, St)
    trig = jnp.cos(theta)                                      # cos | sin fused
    prod = jnp.einsum("bcn,bns->bcs", x_ref[...], trig,
                      preferred_element_type=jnp.float32)      # single MXU pass
    out_ref[...] = prod * scale_ref[...]                       # scale + zerocomp


def _choose_tiles(b, n, c, s2, budget_bytes=24 * 1024 * 1024):
    """Pick (batch_tile, samples_tile) so the per-step live set fits VMEM."""

    def live_bytes(bt, st):
        theta = bt * n * st * 4                  # phase + trig intermediates
        x_in = 2 * bt * c * n * 4                # double-buffered input block
        t_in = 2 * bt * n * 128 * 4              # (N, 1) block lane-pads to 128
        vecs = 2 * 3 * 8 * max(st, 128) * 4      # row2 / off / scale blocks
        out = 2 * bt * c * st * 4
        return 2 * theta + x_in + t_in + vecs + out

    # Largest divisor of b that is <= 8 batches per grid step.
    bt = 1
    for cand in range(min(b, 8), 0, -1):
        if b % cand == 0:
            bt = cand
            break

    st = s2
    while bt > 1 and live_bytes(bt, st) > budget_bytes:
        nbt = bt // 2
        while nbt > 1 and b % nbt:
            nbt -= 1
        bt = max(1, nbt)
    while st > 128 and live_bytes(bt, st) > budget_bytes:
        st = max(128, -(-(st // 2) // 128) * 128)   # halve, round up to 128
    return bt, st, live_bytes(bt, st)


def fudft_forward(x, t, freqs, *, real=False):
    """Pallas implementation of FUDFT.forward (learning=False, remove_zerocomp=True)."""
    b, n, c = x.shape
    samples = int(freqs.shape[0])
    s2 = 2 * samples

    # ---- tiny host-side precompute (all heavy work is inside the kernel) ----
    coef = (-2.0 * math.pi * freqs.astype(jnp.float32) * (n - 1) / n)       # (S,)
    row2 = jnp.concatenate([coef, coef]).reshape(1, 1, s2)
    off = jnp.concatenate(
        [jnp.zeros((samples,), jnp.float32),
         jnp.full((samples,), -0.5 * math.pi, jnp.float32)]).reshape(1, 1, s2)
    scale = jnp.full((s2,), 1.0 / math.sqrt(n), dtype=jnp.float32)
    # remove_zerocomp=True: zero sample rows 0 and samples-1 (both halves).
    scale = scale.at[jnp.array([0, samples - 1, samples, s2 - 1])].set(0.0)
    scale = scale.reshape(1, 1, s2)

    x_t = jnp.swapaxes(x.astype(jnp.float32), 1, 2)                   # (B, C, N)
    # NOTE: phase = coef * t*(N-1) is built in f32; for very large N consider a
    # higher-precision mod-2*pi reduction on the host before the kernel.
    t_col = (t.astype(jnp.float32) * (n - 1)).reshape(b, n, 1)        # (B, N, 1)

    bt, st, vmem_est = _choose_tiles(b, n, c, s2)
    grid = (pl.cdiv(b, bt), pl.cdiv(s2, st))

    cost = pl.CostEstimate(
        flops=2 * b * c * n * s2 + 4 * b * n * s2,
        transcendentals=b * n * s2,
        bytes_accessed=4 * (b * c * n + b * n + 3 * s2 + b * c * s2),
    )

    out_t = pl.pallas_call(
        _fudft_kernel,
        out_shape=jax.ShapeDtypeStruct((b, c, s2), jnp.float32),
        grid_spec=pltpu.PrefetchScalarGridSpec(
            num_scalar_prefetch=0,
            grid=grid,
            in_specs=[
                pl.BlockSpec((bt, n, 1), lambda bi, si: (bi, 0, 0)),   # t
                pl.BlockSpec((1, 1, st), lambda bi, si: (0, 0, si)),   # row2
                pl.BlockSpec((1, 1, st), lambda bi, si: (0, 0, si)),   # off
                pl.BlockSpec((1, 1, st), lambda bi, si: (0, 0, si)),   # scale
                pl.BlockSpec((bt, c, n), lambda bi, si: (bi, 0, 0)),   # x^T
            ],
            out_specs=pl.BlockSpec((bt, c, st), lambda bi, si: (bi, 0, si)),
        ),
        compiler_params=pltpu.CompilerParams(
            dimension_semantics=("parallel", "parallel"),
            vmem_limit_bytes=int(min(max(vmem_est + (4 << 20), 16 << 20), 48 << 20)),
        ),
        cost_estimate=cost,
    )(t_col, row2, off, scale, x_t)

    re = jnp.swapaxes(out_t[:, :, :samples], 1, 2)     # (B, samples, C)
    im = jnp.swapaxes(out_t[:, :, samples:], 1, 2)
    if real:
        return jnp.sqrt(re * re + im * im).astype(jnp.float32)
    return lax.complex(re, im)                          # complex64 (torch.cfloat)


def _fudft_reference(x, t, freqs):
    """Pure-JAX reference mirroring the PyTorch math (sanity check)."""
    b, n, c = x.shape
    fr = freqs * (n - 1)
    exponent_rows = -2.0 * jnp.pi * 1j * fr / n                     # (samples,)
    exponent_cols = (t * (n - 1)).astype(jnp.complex64)             # (b, N)
    exponent = jnp.einsum("i,bj->bij", exponent_rows, exponent_cols)
    fourier = jnp.exp(exponent) / jnp.sqrt(jnp.float32(n))
    transformed = jnp.einsum("bij,bjc->bic", fourier, x.astype(jnp.complex64))
    transformed = transformed.at[:, 0].set(0).at[:, -1].set(0)
    return transformed


if __name__ == "__main__":
    B, N, C, SAMPLES = 2, 16, 4, 8

    key = jax.random.PRNGKey(0)
    kx, kt = jax.random.split(key)
    x = jax.random.normal(kx, (B, N, C), dtype=jnp.float32)
    t = jax.random.uniform(kt, (B, N), dtype=jnp.float32)          # sample times
    freqs = jnp.linspace(0.0, 1.0, SAMPLES, dtype=jnp.float32)     # module param init

    out = fudft_forward(x, t, freqs)
    out = jax.block_until_ready(out)

    ref = _fudft_reference(x, t, freqs)
    assert out.shape == (B, SAMPLES, C) and out.dtype == jnp.complex64
    assert jnp.allclose(out, ref, atol=1e-3, rtol=1e-3)

    out_real = jax.block_until_ready(fudft_forward(x, t, freqs, real=True))
    assert out_real.shape == (B, SAMPLES, C) and out_real.dtype == jnp.float32
    assert jnp.allclose(out_real, jnp.abs(ref), atol=1e-3, rtol=1e-3)

    print("KERNEL_OK")
</pallas_src>

<mosaic_0001>
module attributes {stable_mosaic.version = 11 : i64} {
  func.func @_fudft_kernel(%arg0: i32, %arg1: i32, %arg2: memref<2x16x1xf32, #tpu.memory_space<vmem>>, %arg3: memref<1x1x16xf32, #tpu.memory_space<vmem>>, %arg4: memref<1x1x16xf32, #tpu.memory_space<vmem>>, %arg5: memref<1x1x16xf32, #tpu.memory_space<vmem>>, %arg6: memref<2x4x16xf32, #tpu.memory_space<vmem>>, %arg7: memref<2x4x16xf32, #tpu.memory_space<vmem>>) attributes {dimension_semantics = [#tpu.dimension_semantics<parallel>, #tpu.dimension_semantics<parallel>], iteration_bounds = array<i64: 1, 1>, scalar_prefetch = 0 : i64, scratch_operands = 0 : i64, tpu.core_type = #tpu.core_type<tc>, window_params = [{transform_indices = @transform_0, window_bounds = array<i64: 2, 16, 1>}, {transform_indices = @transform_1, window_bounds = array<i64: 1, 1, 16>}, {transform_indices = @transform_2, window_bounds = array<i64: 1, 1, 16>}, {transform_indices = @transform_3, window_bounds = array<i64: 1, 1, 16>}, {transform_indices = @transform_4, window_bounds = array<i64: 2, 4, 16>}, {transform_indices = @transform_5, window_bounds = array<i64: 2, 4, 16>}]} {
    %c0 = arith.constant 0 : index
    %c0_0 = arith.constant 0 : index
    %c0_1 = arith.constant 0 : index
    %0 = vector.load %arg2[%c0, %c0_0, %c0_1] : memref<2x16x1xf32, #tpu.memory_space<vmem>>, vector<2x16x1xf32>
    %c0_2 = arith.constant 0 : index
    %c0_3 = arith.constant 0 : index
    %c0_4 = arith.constant 0 : index
    %1 = vector.load %arg3[%c0_2, %c0_3, %c0_4] : memref<1x1x16xf32, #tpu.memory_space<vmem>>, vector<1x1x16xf32>
    %2 = vector.broadcast %0 : vector<2x16x1xf32> to vector<2x16x16xf32>
    %3 = vector.broadcast %1 : vector<1x1x16xf32> to vector<2x16x16xf32>
    %4 = arith.mulf %2, %3 : vector<2x16x16xf32>
    %c0_5 = arith.constant 0 : index
    %c0_6 = arith.constant 0 : index
    %c0_7 = arith.constant 0 : index
    %5 = vector.load %arg4[%c0_5, %c0_6, %c0_7] : memref<1x1x16xf32, #tpu.memory_space<vmem>>, vector<1x1x16xf32>
    %6 = vector.broadcast %5 : vector<1x1x16xf32> to vector<2x16x16xf32>
    %7 = arith.addf %4, %6 : vector<2x16x16xf32>
    %8 = math.cos %7 : vector<2x16x16xf32>
    %c0_8 = arith.constant 0 : index
    %c0_9 = arith.constant 0 : index
    %c0_10 = arith.constant 0 : index
    %9 = vector.load %arg6[%c0_8, %c0_9, %c0_10] : memref<2x4x16xf32, #tpu.memory_space<vmem>>, vector<2x4x16xf32>
    "tpu.trace_start"() <{level = 10 : i32, message = "bcn,bns->bcs"}> : () -> ()
    %cst = arith.constant dense<0.000000e+00> : vector<2x4x16xf32>
    %10 = tpu.matmul %9, %8, %cst {dimension_numbers = #tpu.dot_dimension_numbers<[2], [1], [1], [2], [0, 0, 0, 1, 1, 2], [0], [0]>} : vector<2x4x16xf32>, vector<2x16x16xf32>, vector<2x4x16xf32> -> vector<2x4x16xf32>
    "tpu.trace_stop"() : () -> ()
    %c0_11 = arith.constant 0 : index
    %c0_12 = arith.constant 0 : index
    %c0_13 = arith.constant 0 : index
    %11 = vector.load %arg5[%c0_11, %c0_12, %c0_13] : memref<1x1x16xf32, #tpu.memory_space<vmem>>, vector<1x1x16xf32>
    %12 = vector.broadcast %11 : vector<1x1x16xf32> to vector<2x4x16xf32>
    %13 = arith.mulf %10, %12 : vector<2x4x16xf32>
    %c0_14 = arith.constant 0 : index
    %c0_15 = arith.constant 0 : index
    %c0_16 = arith.constant 0 : index
    %14 = vector.load %arg7[%c0_14, %c0_15, %c0_16] : memref<2x4x16xf32, #tpu.memory_space<vmem>>, vector<2x4x16xf32>
    tpu.vector_store %arg7[%c0_14, %c0_15, %c0_16], %13 {strides = array<i32>} : memref<2x4x16xf32, #tpu.memory_space<vmem>>, vector<2x4x16xf32>,
    return
  }
  func.func @transform_0(%arg0: i32, %arg1: i32) -> (i32, i32, i32) {
    %c0_i32 = arith.constant 0 : i32
    %c0_i32_0 = arith.constant 0 : i32
    %c0_i32_1 = arith.constant 0 : i32
    return %arg0, %c0_i32, %c0_i32_0 : i32, i32, i32
  }
  func.func @transform_1(%arg0: i32, %arg1: i32) -> (i32, i32, i32) {
    %c0_i32 = arith.constant 0 : i32
    %c0_i32_0 = arith.constant 0 : i32
    %c0_i32_1 = arith.constant 0 : i32
    return %c0_i32, %c0_i32_0, %arg1 : i32, i32, i32
  }
  func.func @transform_2(%arg0: i32, %arg1: i32) -> (i32, i32, i32) {
    %c0_i32 = arith.constant 0 : i32
    %c0_i32_0 = arith.constant 0 : i32
    %c0_i32_1 = arith.constant 0 : i32
    return %c0_i32, %c0_i32_0, %arg1 : i32, i32, i32
  }
  func.func @transform_3(%arg0: i32, %arg1: i32) -> (i32, i32, i32) {
    %c0_i32 = arith.constant 0 : i32
    %c0_i32_0 = arith.constant 0 : i32
    %c0_i32_1 = arith.constant 0 : i32
    return %c0_i32, %c0_i32_0, %arg1 : i32, i32, i32
  }
  func.func @transform_4(%arg0: i32, %arg1: i32) -> (i32, i32, i32) {
    %c0_i32 = arith.constant 0 : i32
    %c0_i32_0 = arith.constant 0 : i32
    %c0_i32_1 = arith.constant 0 : i32
    return %arg0, %c0_i32, %c0_i32_0 : i32, i32, i32
  }
  func.func @transform_5(%arg0: i32, %arg1: i32) -> (i32, i32, i32) {
    %c0_i32 = arith.constant 0 : i32
    %c0_i32_0 = arith.constant 0 : i32
    return %arg0, %c0_i32, %arg1 : i32, i32, i32
  }
}

</mosaic_0001>

<llo_original>
// kernel: tpu_custom_call.1
$region0: #{tpu_custom_call.1}
  #allocation0 [shape = 'u32[]', space=smem, size = 0x4, offset = 0x4, fixed_abs, tag = 'smem constant byte address 0x4 - core index']
  #allocation1 [shape = 'u32[144,128]{1,0:T(1,128)}', space=vmem, size = 0x12000, scoped, tag = 'internal scratch']
  %s0 = inlined_call_operand.vmem [shape: f32[2,16,1], index: 0, kind: input, shape index: {}]
  %s1 = inlined_call_operand.vmem [shape: f32[1,1,16], index: 1, kind: input, shape index: {}]
  %s2 = inlined_call_operand.vmem [shape: f32[1,1,16], index: 2, kind: input, shape index: {}]
  %s3 = inlined_call_operand.vmem [shape: f32[1,1,16], index: 3, kind: input, shape index: {}]
  %s4 = inlined_call_operand.vmem [shape: f32[2,4,16], index: 4, kind: input, shape index: {}]
  %s5 = inlined_call_operand.hbm [shape: f32[2,4,16], index: 5, kind: output, shape index: {}]
  %s6 = sld [smem:[#allocation0]]
  $region30: #{tpu_custom_call.1} parent=0
    _
  %s8 = ssub.s32 1, %s6
  %s9 = scalar_select 0, %s8, %s6
  $region1: #{tpu_custom_call.1} parent=0
    #allocation2 [shape = 'u8[4096]{0}', space=vmem, size = 0x1000, scoped, tag = 'output window, operand 0, single buffered']
    #allocation3 [shape = 's32[1]{0}', space=sflag, size = 0x4, scoped, tag = 'scoped memory for tpu_custom_call.1']
    %10 = vsyncpa [#allocation3], 0
    // Predicated region
    $region2: #{tpu_custom_call.1} parent=1 // pred_check
      _
    $region3: #{tpu_custom_call.1} parent=1 // pred_check_branch
      %12 = sbr.rel (0) target = $region5
    $region4: #{tpu_custom_call.1} parent=1 // pred_region
      _
    $region5: #{tpu_custom_call.1} parent=1 // pred_fallthru
      _
    // Predicated region
    $region6: #{tpu_custom_call.1} parent=1 // pred_check
      _
    $region7: #{tpu_custom_call.1} parent=1 // pred_check_branch
      %14 = sbr.rel (0) target = $region9
    $region8: #{tpu_custom_call.1} parent=1 // pred_region
      _
    $region9: #{tpu_custom_call.1} parent=1 // pred_fallthru
      _
    // Predicated region
    $region10: #{tpu_custom_call.1} parent=1 // pred_check
      _
    $region11: #{tpu_custom_call.1} parent=1 // pred_check_branch
      %16 = sbr.rel (0) target = $region13
    $region12: #{tpu_custom_call.1} parent=1 // pred_region
      _
    $region13: #{tpu_custom_call.1} parent=1 // pred_fallthru
      _
    // Predicated region
    $region14: #{tpu_custom_call.1} parent=1 // pred_check
      _
    $region15: #{tpu_custom_call.1} parent=1 // pred_check_branch
      %18 = sbr.rel (0) target = $region17
    $region16: #{tpu_custom_call.1} parent=1 // pred_region
      _
    $region17: #{tpu_custom_call.1} parent=1 // pred_fallthru
      _
    // Predicated region
    $region18: #{tpu_custom_call.1} parent=1 // pred_check
      _
    $region19: #{tpu_custom_call.1} parent=1 // pred_check_branch
      %20 = sbr.rel (0) target = $region21
    $region20: #{tpu_custom_call.1} parent=1 // pred_region
      _
    $region21: #{tpu_custom_call.1} parent=1 // pred_fallthru
      _
    %v21 = vld [vmem:[%s0] sm:$0xff]
    %v22 = vld [vmem:[%s0 + $0x8] sm:$0xff]
    %v23 = vld [vmem:[%s0 + $0x10] sm:$0xff]
    %v24 = vld [vmem:[%s0 + $0x18] sm:$0xff]
    %v25 = vld [vmem:[%s1] sm:$0x1]
    %27 = vset.pattern.permute.xlu0 0
    %28 = vperm.xlu0 %27, %v21
    %v29 = vpop.permute.xlu0 %28
    %32 = vset.pattern.permute.xlu0 0
    %33 = vperm.xlu0 %32, %v22
    %v34 = vpop.permute.xlu0 %33
    %37 = vset.pattern.permute.xlu0 0
    %38 = vperm.xlu0 %37, %v23
    %v39 = vpop.permute.xlu0 %38
    %42 = vset.pattern.permute.xlu0 0
    %43 = vperm.xlu0 %42, %v24
    %v44 = vpop.permute.xlu0 %43
    %v47 = vlaneseq
    %v48 = vshrl.u32 %v47, 7
    %v49 = vsub.s32 0, %v48
    %v50 = vrot.slane %v25, %v49
    %v52 = vmul.f32 %v29, %v50
    %v53 = vmul.f32 %v34, %v50
    %v54 = vmul.f32 %v39, %v50
    %v55 = vmul.f32 %v44, %v50
    %v56 = vld [vmem:[%s2] sm:$0x1]
    %v58 = vlaneseq
    %v59 = vshrl.u32 %v58, 7
    %v60 = vsub.s32 0, %v59
    %v61 = vrot.slane %v56, %v60
    %v63 = vadd.f32 %v52, %v61
    %v64 = vadd.f32 %v53, %v61
    %v65 = vadd.f32 %v54, %v61
    %v66 = vadd.f32 %v55, %v61
    %v67 = vand.u32 2147483647, %v63
    %vm68 = vcmp.le.f32.partialorder %v67, 0.7853982
    %vm69 = vcmp.lt.s32.totalorder %v63, 0
    %v70 = vand.u32 %v63, 2139095040
    %v71 = vshrl.u32 %v70, 23
    %v72 = vsub.s32 %v71, 127
    %v73 = vand.u32 2147483647, %v63
    %v74 = vand.u32 %v73, 8388607
    %v75 = vor.u32 %v74, 8388608
    %v76 = vsub.s32 0, %v75
    %v77 = vadd.s32 %v72, 1
    %vm78 = vcmp.gt.s32.totalorder %v77, 0
    %v79 = vsel %vm78, %v77, 0
    %v80 = vshrl.u32 %v79, 5
    %v81 = vand.u32 %v79, 31
    %v82 = vsub.s32 32, %v81
    %v83 = vshrl.u32 683565275, %v82
    %v84 = vshll.u32 683565275, %v81
    %v85 = vshrl.u32 2475754826, %v82
    %v86 = vor.u32 %v84, %v85
    %v87 = vshll.u32 2475754826, %v81
    %v88 = vshrl.u32 2131351028, %v82
    %v89 = vor.u32 %v87, %v88
    %v90 = vshll.u32 2131351028, %v81
    %v91 = vshrl.u32 2102212464, %v82
    %v92 = vor.u32 %v90, %v91
    %v93 = vshll.u32 2102212464, %v81
    %v94 = vshrl.u32 920167782, %v82
    %v95 = vor.u32 %v93, %v94
    %v96 = vshll.u32 920167782, %v81
    %v97 = vshrl.u32 1326507024, %v82
    %v98 = vor.u32 %v96, %v97
    %vm99 = vcmp.lt.s32.totalorder %v80, 1
    %vm100 = vcmp.lt.s32.totalorder %v80, 2
    %vm101 = vcmp.lt.s32.totalorder %v80, 3
    %vm102 = vcmp.lt.s32.totalorder %v80, 4
    %v103 = vsel %vm99, %v83, %v86
    %v104 = vsel %vm102, %v92, 2102212464
    %v105 = vsel %vm101, %v89, %v104
    %v106 = vsel %vm100, %v103, %v105
    %v107 = vsel %vm99, %v86, %v89
    %v108 = vsel %vm102, %v95, 920167782
    %v109 = vsel %vm101, %v92, %v108
    %v110 = vsel %vm100, %v107, %v109
    %v111 = vsel %vm99, %v89, %v92
    %v112 = vsel %vm102, %v98, 1326507024
    %v113 = vsel %vm101, %v95, %v112
    %v114 = vsel %vm100, %v111, %v113
    %v115 = vshll.u32 %v75, 8
    %v116 = vmul.u32.u64.compose %v115, %v114
    %v117 = vextract.low.u32 %v116
    %v118 = vextract.high.u32 %v116
    %v119 = vmul.u32.u64.compose %v115, %v110
    %v120 = vextract.low.u32 %v119
    %v121 = vextract.high.u32 %v119
    %v122 = vmul.u32 %v115, %v106
    %v123 = vadd.s32 %v118, %v120
    %vm124 = vc.u32 %v118, %v120
    %v125 = vadd.s32 %v121, 1
    %v126 = vsel %vm124, %v125, %v121
    %v127 = vadd.s32 %v122, %v126
    %v128 = vadd.s32 %v127, 536870912
    %v129 = vshrl.u32 %v128, 30
    %v130 = vshll.u32 %v129, 30
    %v131 = vsub.s32 %v127, %v130
    %vm132 = vcmp.lt.s32.totalorder %v131, 0
    %v133 = vsub.s32 0, %v131
    %v134 = vsel %vm132, %v133, %v131
    %v135 = vclz %v134
    %v136 = vsub.s32 %v135, 2
    %vm137 = vcmp.gt.s32.totalorder 0, %v136
    %v138 = vsel %vm137, 0, %v136
    %v139 = vsub.s32 32, %v138
    %v140 = vshll.u32 %v131, %v138
    %v141 = vshrl.u32 %v123, %v139
    %v142 = vor.u32 %v140, %v141
    %v143 = vsub.s32 4294967266, %v138
    %v144 = vadd.s32 %v143, 127
    %v145 = vshll.u32 %v144, 23
    %v146 = vor.u32 4788187, %v145
    %v147 = vand.u32 2147483647, %v146
    %v149 = vcvt.s32.f32 %v142
    %v150 = vmul.f32 %v149, %v147
    %v151 = vxor.u32 %v150, 2147483648
    %v152 = vsel %vm69, %v151, %v150
    %v153 = vsub.s32 4, %v129
    %v154 = vsel %vm69, %v153, %v129
    %v155 = vsel %vm68, %v63, %v152
    %v156 = vsel %vm68, 0, %v154
    %v157 = vcosq.f32.pop %v155
    %v158 = vsinq.f32.pop %v155
    %vm159 = vweird.f32 %v63
    %v160 = vand.u32 %v156, 3
    %vm161 = vcmp.lt.s32.totalorder %v160, 2
    %vm162 = vcmp.eq.s32.totalorder %v160, 0
    %v163 = vxor.u32 %v158, 2147483648
    %v164 = vsel %vm162, %v157, %v163
    %vm165 = vcmp.eq.s32.totalorder %v160, 2
    %v166 = vxor.u32 %v157, 2147483648
    %v167 = vsel %vm165, %v166, %v158
    %v168 = vsel %vm161, %v164, %v167
    %v169 = vsel %vm159, nan, %v168
    %v170 = vand.u32 2147483647, %v64
    %vm171 = vcmp.le.f32.partialorder %v170, 0.7853982
    %vm172 = vcmp.lt.s32.totalorder %v64, 0
    %v173 = vand.u32 %v64, 2139095040
    %v174 = vshrl.u32 %v173, 23
    %v175 = vsub.s32 %v174, 127
    %v176 = vand.u32 2147483647, %v64
    %v177 = vand.u32 %v176, 8388607
    %v178 = vor.u32 %v177, 8388608
    %v179 = vsub.s32 0, %v178
    %v180 = vadd.s32 %v175, 1
    %vm181 = vcmp.gt.s32.totalorder %v180, 0
    %v182 = vsel %vm181, %v180, 0
    %v183 = vshrl.u32 %v182, 5
    %v184 = vand.u32 %v182, 31
    %v185 = vsub.s32 32, %v184
    %v186 = vshrl.u32 683565275, %v185
    %v187 = vshll.u32 683565275, %v184
    %v188 = vshrl.u32 2475754826, %v185
    %v189 = vor.u32 %v187, %v188
    %v190 = vshll.u32 2475754826, %v184
    %v191 = vshrl.u32 2131351028, %v185
    %v192 = vor.u32 %v190, %v191
    %v193 = vshll.u32 2131351028, %v184
    %v194 = vshrl.u32 2102212464, %v185
    %v195 = vor.u32 %v193, %v194
    %v196 = vshll.u32 2102212464, %v184
    %v197 = vshrl.u32 920167782, %v185
    %v198 = vor.u32 %v196, %v197
    %v199 = vshll.u32 920167782, %v184
    %v200 = vshrl.u32 1326507024, %v185
    %v201 = vor.u32 %v199, %v200
    %vm202 = vcmp.lt.s32.totalorder %v183, 1
    %vm203 = vcmp.lt.s32.totalorder %v183, 2
    %vm204 = vcmp.lt.s32.totalorder %v183, 3
    %vm205 = vcmp.lt.s32.totalorder %v183, 4
    %v206 = vsel %vm202, %v186, %v189
    %v207 = vsel %vm205, %v195, 2102212464
    %v208 = vsel %vm204, %v192, %v207
    %v209 = vsel %vm203, %v206, %v208
    %v210 = vsel %vm202, %v189, %v192
    %v211 = vsel %vm205, %v198, 920167782
    %v212 = vsel %vm204, %v195, %v211
    %v213 = vsel %vm203, %v210, %v212
    %v214 = vsel %vm202, %v192, %v195
    %v215 = vsel %vm205, %v201, 1326507024
    %v216 = vsel %vm204, %v198, %v215
    %v217 = vsel %vm203, %v214, %v216
    %v218 = vshll.u32 %v178, 8
    %v219 = vmul.u32.u64.compose %v218, %v217
    %v220 = vextract.low.u32 %v219
    %v221 = vextract.high.u32 %v219
    %v222 = vmul.u32.u64.compose %v218, %v213
    %v223 = vextract.low.u32 %v222
    %v224 = vextract.high.u32 %v222
    %v225 = vmul.u32 %v218, %v209
    %v226 = vadd.s32 %v221, %v223
    %vm227 = vc.u32 %v221, %v223
    %v228 = vadd.s32 %v224, 1
    %v229 = vsel %vm227, %v228, %v224
    %v230 = vadd.s32 %v225, %v229
    %v231 = vadd.s32 %v230, 536870912
    %v232 = vshrl.u32 %v231, 30
    %v233 = vshll.u32 %v232, 30
    %v234 = vsub.s32 %v230, %v233
    %vm235 = vcmp.lt.s32.totalorder %v234, 0
    %v236 = vsub.s32 0, %v234
    %v237 = vsel %vm235, %v236, %v234
    %v238 = vclz %v237
    %v239 = vsub.s32 %v238, 2
    %vm240 = vcmp.gt.s32.totalorder 0, %v239
    %v241 = vsel %vm240, 0, %v239
    %v242 = vsub.s32 32, %v241
    %v243 = vshll.u32 %v234, %v241
    %v244 = vshrl.u32 %v226, %v242
    %v245 = vor.u32 %v243, %v244
    %v246 = vsub.s32 4294967266, %v241
    %v247 = vadd.s32 %v246, 127
    %v248 = vshll.u32 %v247, 23
    %v249 = vor.u32 4788187, %v248
    %v250 = vand.u32 2147483647, %v249
    %v252 = vcvt.s32.f32 %v245
    %v253 = vmul.f32 %v252, %v250
    %v254 = vxor.u32 %v253, 2147483648
    %v255 = vsel %vm172, %v254, %v253
    %v256 = vsub.s32 4, %v232
    %v257 = vsel %vm172, %v256, %v232
    %v258 = vsel %vm171, %v64, %v255
    %v259 = vsel %vm171, 0, %v257
    %v260 = vcosq.f32.pop %v258
    %v261 = vsinq.f32.pop %v258
    %vm262 = vweird.f32 %v64
    %v263 = vand.u32 %v259, 3
    %vm264 = vcmp.lt.s32.totalorder %v263, 2
    %vm265 = vcmp.eq.s32.totalorder %v263, 0
    %v266 = vxor.u32 %v261, 2147483648
    %v267 = vsel %vm265, %v260, %v266
    %vm268 = vcmp.eq.s32.totalorder %v263, 2
    %v269 = vxor.u32 %v260, 2147483648
    %v270 = vsel %vm268, %v269, %v261
    %v271 = vsel %vm264, %v267, %v270
    %v272 = vsel %vm262, nan, %v271
    %v273 = vand.u32 2147483647, %v65
    %vm274 = vcmp.le.f32.partialorder %v273, 0.7853982
    %vm275 = vcmp.lt.s32.totalorder %v65, 0
    %v276 = vand.u32 %v65, 2139095040
    %v277 = vshrl.u32 %v276, 23
    %v278 = vsub.s32 %v277, 127
    %v279 = vand.u32 2147483647, %v65
    %v280 = vand.u32 %v279, 8388607
    %v281 = vor.u32 %v280, 8388608
    %v282 = vsub.s32 0, %v281
    %v283 = vadd.s32 %v278, 1
    %vm284 = vcmp.gt.s32.totalorder %v283, 0
    %v285 = vsel %vm284, %v283, 0
    %v286 = vshrl.u32 %v285, 5
    %v287 = vand.u32 %v285, 31
    %v288 = vsub.s32 32, %v287
    %v289 = vshrl.u32 683565275, %v288
    %v290 = vshll.u32 683565275, %v287
    %v291 = vshrl.u32 2475754826, %v288
    %v292 = vor.u32 %v290, %v291
    %v293 = vshll.u32 2475754826, %v287
    %v294 = vshrl.u32 2131351028, %v288
    %v295 = vor.u32 %v293, %v294
    %v296 = vshll.u32 2131351028, %v287
    %v297 = vshrl.u32 2102212464, %v288
    %v298 = vor.u32 %v296, %v297
    %v299 = vshll.u32 2102212464, %v287
    %v300 = vshrl.u32 920167782, %v288
    %v301 = vor.u32 %v299, %v300
    %v302 = vshll.u32 920167782, %v287
    %v303 = vshrl.u32 1326507024, %v288
    %v304 = vor.u32 %v302, %v303
    %vm305 = vcmp.lt.s32.totalorder %v286, 1
    %vm306 = vcmp.lt.s32.totalorder %v286, 2
    %vm307 = vcmp.lt.s32.totalorder %v286, 3
    %vm308 = vcmp.lt.s32.totalorder %v286, 4
    %v309 = vsel %vm305, %v289, %v292
    %v310 = vsel %vm308, %v298, 2102212464
    %v311 = vsel %vm307, %v295, %v310
    %v312 = vsel %vm306, %v309, %v311
    %v313 = vsel %vm305, %v292, %v295
    %v314 = vsel %vm308, %v301, 920167782
    %v315 = vsel %vm307, %v298, %v314
    %v316 = vsel %vm306, %v313, %v315
    %v317 = vsel %vm305, %v295, %v298
    %v318 = vsel %vm308, %v304, 1326507024
    %v319 = vsel %vm307, %v301, %v318
    %v320 = vsel %vm306, %v317, %v319
    %v321 = vshll.u32 %v281, 8
    %v322 = vmul.u32.u64.compose %v321, %v320
    %v323 = vextract.low.u32 %v322
    %v324 = vextract.high.u32 %v322
    %v325 = vmul.u32.u64.compose %v321, %v316
    %v326 = vextract.low.u32 %v325
    %v327 = vextract.high.u32 %v325
    %v328 = vmul.u32 %v321, %v312
    %v329 = vadd.s32 %v324, %v326
    %vm330 = vc.u32 %v324, %v326
    %v331 = vadd.s32 %v327, 1
    %v332 = vsel %vm330, %v331, %v327
    %v333 = vadd.s32 %v328, %v332
    %v334 = vadd.s32 %v333, 536870912
    %v335 = vshrl.u32 %v334, 30
    %v336 = vshll.u32 %v335, 30
    %v337 = vsub.s32 %v333, %v336
    %vm338 = vcmp.lt.s32.totalorder %v337, 0
    %v339 = vsub.s32 0, %v337
    %v340 = vsel %vm338, %v339, %v337
    %v341 = vclz %v340
    %v342 = vsub.s32 %v341, 2
    %vm343 = vcmp.gt.s32.totalorder 0, %v342
    %v344 = vsel %vm343, 0, %v342
    %v345 = vsub.s32 32, %v344
    %v346 = vshll.u32 %v337, %v344
    %v347 = vshrl.u32 %v329, %v345
    %v348 = vor.u32 %v346, %v347
    %v349 = vsub.s32 4294967266, %v344
    %v350 = vadd.s32 %v349, 127
    %v351 = vshll.u32 %v350, 23
    %v352 = vor.u32 4788187, %v351
    %v353 = vand.u32 2147483647, %v352
    %v355 = vcvt.s32.f32 %v348
    %v356 = vmul.f32 %v355, %v353
    %v357 = vxor.u32 %v356, 2147483648
    %v358 = vsel %vm275, %v357, %v356
    %v359 = vsub.s32 4, %v335
    %v360 = vsel %vm275, %v359, %v335
    %v361 = vsel %vm274, %v65, %v358
    %v362 = vsel %vm274, 0, %v360
    %v363 = vcosq.f32.pop %v361
    %v364 = vsinq.f32.pop %v361
    %vm365 = vweird.f32 %v65
    %v366 = vand.u32 %v362, 3
    %vm367 = vcmp.lt.s32.totalorder %v366, 2
    %vm368 = vcmp.eq.s32.totalorder %v366, 0
    %v369 = vxor.u32 %v364, 2147483648
    %v370 = vsel %vm368, %v363, %v369
    %vm371 = vcmp.eq.s32.totalorder %v366, 2
    %v372 = vxor.u32 %v363, 2147483648
    %v373 = vsel %vm371, %v372, %v364
    %v374 = vsel %vm367, %v370, %v373
    %v375 = vsel %vm365, nan, %v374
    %v376 = vand.u32 2147483647, %v66
    %vm377 = vcmp.le.f32.partialorder %v376, 0.7853982
    %vm378 = vcmp.lt.s32.totalorder %v66, 0
    %v379 = vand.u32 %v66, 2139095040
    %v380 = vshrl.u32 %v379, 23
    %v381 = vsub.s32 %v380, 127
    %v382 = vand.u32 2147483647, %v66
    %v383 = vand.u32 %v382, 8388607
    %v384 = vor.u32 %v383, 8388608
    %v385 = vsub.s32 0, %v384
    %v386 = vadd.s32 %v381, 1
    %vm387 = vcmp.gt.s32.totalorder %v386, 0
    %v388 = vsel %vm387, %v386, 0
    %v389 = vshrl.u32 %v388, 5
    %v390 = vand.u32 %v388, 31
    %v391 = vsub.s32 32, %v390
    %v392 = vshrl.u32 683565275, %v391
    %v393 = vshll.u32 683565275, %v390
    %v394 = vshrl.u32 2475754826, %v391
    %v395 = vor.u32 %v393, %v394
    %v396 = vshll.u32 2475754826, %v390
    %v397 = vshrl.u32 2131351028, %v391
    %v398 = vor.u32 %v396, %v397
    %v399 = vshll.u32 2131351028, %v390
    %v400 = vshrl.u32 2102212464, %v391
    %v401 = vor.u32 %v399, %v400
    %v402 = vshll.u32 2102212464, %v390
    %v403 = vshrl.u32 920167782, %v391
    %v404 = vor.u32 %v402, %v403
    %v405 = vshll.u32 920167782, %v390
    %v406 = vshrl.u32 1326507024, %v391
    %v407 = vor.u32 %v405, %v406
    %vm408 = vcmp.lt.s32.totalorder %v389, 1
    %vm409 = vcmp.lt.s32.totalorder %v389, 2
    %vm410 = vcmp.lt.s32.totalorder %v389, 3
    %vm411 = vcmp.lt.s32.totalorder %v389, 4
    %v412 = vsel %vm408, %v392, %v395
    %v413 = vsel %vm411, %v401, 2102212464
    %v414 = vsel %vm410, %v398, %v413
    %v415 = vsel %vm409, %v412, %v414
    %v416 = vsel %vm408, %v395, %v398
    %v417 = vsel %vm411, %v404, 920167782
    %v418 = vsel %vm410, %v401, %v417
    %v419 = vsel %vm409, %v416, %v418
    %v420 = vsel %vm408, %v398, %v401
    %v421 = vsel %vm411, %v407, 1326507024
    %v422 = vsel %vm410, %v404, %v421
    %v423 = vsel %vm409, %v420, %v422
    %v424 = vshll.u32 %v384, 8
    %v425 = vmul.u32.u64.compose %v424, %v423
    %v426 = vextract.low.u32 %v425
    %v427 = vextract.high.u32 %v425
    %v428 = vmul.u32.u64.compose %v424, %v419
    %v429 = vextract.low.u32 %v428
    %v430 = vextract.high.u32 %v428
    %v431 = vmul.u32 %v424, %v415
    %v432 = vadd.s32 %v427, %v429
    %vm433 = vc.u32 %v427, %v429
    %v434 = vadd.s32 %v430, 1
    %v435 = vsel %vm433, %v434, %v430
    %v436 = vadd.s32 %v431, %v435
    %v437 = vadd.s32 %v436, 536870912
    %v438 = vshrl.u32 %v437, 30
    %v439 = vshll.u32 %v438, 30
    %v440 = vsub.s32 %v436, %v439
    %vm441 = vcmp.lt.s32.totalorder %v440, 0
    %v442 = vsub.s32 0, %v440
    %v443 = vsel %vm441, %v442, %v440
    %v444 = vclz %v443
    %v445 = vsub.s32 %v444, 2
    %vm446 = vcmp.gt.s32.totalorder 0, %v445
    %v447 = vsel %vm446, 0, %v445
    %v448 = vsub.s32 32, %v447
    %v449 = vshll.u32 %v440, %v447
    %v450 = vshrl.u32 %v432, %v448
    %v451 = vor.u32 %v449, %v450
    %v452 = vsub.s32 4294967266, %v447
    %v453 = vadd.s32 %v452, 127
    %v454 = vshll.u32 %v453, 23
    %v455 = vor.u32 4788187, %v454
    %v456 = vand.u32 2147483647, %v455
    %v458 = vcvt.s32.f32 %v451
    %v459 = vmul.f32 %v458, %v456
    %v460 = vxor.u32 %v459, 2147483648
    %v461 = vsel %vm378, %v460, %v459
    %v462 = vsub.s32 4, %v438
    %v463 = vsel %vm378, %v462, %v438
    %v464 = vsel %vm377, %v66, %v461
    %v465 = vsel %vm377, 0, %v463
    %v466 = vcosq.f32.pop %v464
    %v467 = vsinq.f32.pop %v464
    %vm468 = vweird.f32 %v66
    %v469 = vand.u32 %v465, 3
    %vm470 = vcmp.lt.s32.totalorder %v469, 2
    %vm471 = vcmp.eq.s32.totalorder %v469, 0
    %v472 = vxor.u32 %v467, 2147483648
    %v473 = vsel %vm471, %v466, %v472
    %vm474 = vcmp.eq.s32.totalorder %v469, 2
    %v475 = vxor.u32 %v466, 2147483648
    %v476 = vsel %vm474, %v475, %v467
    %v477 = vsel %vm470, %v473, %v476
    %v478 = vsel %vm468, nan, %v477
    %v479 = vld [vmem:[%s4] sm:$0xf]
    %v480 = vld [vmem:[%s4 + $0x4] sm:$0xf]
    %vm481 = vcmask 130048
    %v483 = vsel %vm481, %v479, 0
    %485 = vmatprep.subr.mxu0 0.0
    %486 = vmatpush1.msra.mxu0 %v169
    %487 = vmatprep.subr.mxu0 0.0
    %488 = vmatpush1.msra.mxu0 %v272
    %489 = vmatprep.subr.mxu0 0.0
    %490 = vmatpush1.msra.mxu0 0.0
    %491 = vmatprep.subr.mxu0 0.0
    %492 = vmatpush1.msra.mxu0 0.0
    %493 = vmatprep.subr.mxu0 0.0
    %494 = vmatpush1.msra.mxu0 0.0
    %495 = vmatprep.subr.mxu0 0.0
    %496 = vmatpush1.msra.mxu0 0.0
    %497 = vmatprep.subr.mxu0 0.0
    %498 = vmatpush1.msra.mxu0 0.0
    %499 = vmatprep.subr.mxu0 0.0
    %500 = vmatpush1.msra.mxu0 0.0
    %501 = vmatprep.subr.mxu0 0.0
    %502 = vmatpush1.msra.mxu0 0.0
    %503 = vmatprep.subr.mxu0 0.0
    %504 = vmatpush1.msra.mxu0 0.0
    %505 = vmatprep.subr.mxu0 0.0
    %506 = vmatpush1.msra.mxu0 0.0
    %507 = vmatprep.subr.mxu0 0.0
    %508 = vmatpush1.msra.mxu0 0.0
    %509 = vmatprep.subr.mxu0 0.0
    %510 = vmatpush1.msra.mxu0 0.0
    %511 = vmatprep.subr.mxu0 0.0
    %512 = vmatpush1.msra.mxu0 0.0
    %513 = vmatprep.subr.mxu0 0.0
    %514 = vmatpush1.msra.mxu0 0.0
    %515 = vmatprep.subr.mxu0 0.0
    %516 = vmatpush1.msra.mxu0 0.0
    %517 = vmatprep.subr.mxu0 0.0
    %518 = vmatpush1.msra.mxu0 0.0
    %519 = vmatprep.subr.mxu0 0.0
    %520 = vmatpush1.msra.mxu0 0.0
    %521 = vmatprep.subr.mxu0 0.0
    %522 = vmatpush1.msra.mxu0 0.0
    %523 = vmatprep.subr.mxu0 0.0
    %524 = vmatpush1.msra.mxu0 0.0
    %525 = vmatprep.subr.mxu0 0.0
    %526 = vmatpush1.msra.mxu0 0.0
    %527 = vmatprep.subr.mxu0 0.0
    %528 = vmatpush1.msra.mxu0 0.0
    %529 = vmatprep.subr.mxu0 0.0
    %530 = vmatpush1.msra.mxu0 0.0
    %531 = vmatprep.subr.mxu0 0.0
    %532 = vmatpush1.msra.mxu0 0.0
    %533 = vmatprep.subr.mxu0 0.0
    %534 = vmatpush1.msra.mxu0 0.0
    %535 = vmatprep.subr.mxu0 0.0
    %536 = vmatpush1.msra.mxu0 0.0
    %537 = vmatprep.subr.mxu0 0.0
    %538 = vmatpush1.msra.mxu0 0.0
    %539 = vmatprep.subr.mxu0 0.0
    %540 = vmatpush1.msra.mxu0 0.0
    %541 = vmatprep.subr.mxu0 0.0
    %542 = vmatpush1.msra.mxu0 0.0
    %543 = vmatprep.subr.mxu0 0.0
    %544 = vmatpush1.msra.mxu0 0.0
    %545 = vmatprep.subr.mxu0 0.0
    %546 = vmatpush1.msra.mxu0 0.0
    %547 = vmatprep.subr.mxu0 0.0
    %548 = vmatpush1.msra.mxu0 0.0
    %549 = vmatprep.mubr.f32.mxu0 0.0
    %550 = vmatmul.mubr.f32.gmra.mrb[0].mxu0 %v483
    %v551 = vpop.f32.mrb[0].mxu0
    %v552 = vadd.f32 0.0, %v551
    %v553 = vpop.f32.mrb[0].mxu0
    %554 = vdwg.mxu0
    %v556 = vsel %vm481, %v480, 0
    %558 = vmatprep.subr.mxu0 0.0
    %559 = vmatpush1.msra.mxu0 %v375
    %560 = vmatprep.subr.mxu0 0.0
    %561 = vmatpush1.msra.mxu0 %v478
    %562 = vmatprep.subr.mxu0 0.0
    %563 = vmatpush1.msra.mxu0 0.0
    %564 = vmatprep.subr.mxu0 0.0
    %565 = vmatpush1.msra.mxu0 0.0
    %566 = vmatprep.subr.mxu0 0.0
    %567 = vmatpush1.msra.mxu0 0.0
    %568 = vmatprep.subr.mxu0 0.0
    %569 = vmatpush1.msra.mxu0 0.0
    %570 = vmatprep.subr.mxu0 0.0
    %571 = vmatpush1.msra.mxu0 0.0
    %572 = vmatprep.subr.mxu0 0.0
    %573 = vmatpush1.msra.mxu0 0.0
    %574 = vmatprep.subr.mxu0 0.0
    %575 = vmatpush1.msra.mxu0 0.0
    %576 = vmatprep.subr.mxu0 0.0
    %577 = vmatpush1.msra.mxu0 0.0
    %578 = vmatprep.subr.mxu0 0.0
    %579 = vmatpush1.msra.mxu0 0.0
    %580 = vmatprep.subr.mxu0 0.0
    %581 = vmatpush1.msra.mxu0 0.0
    %582 = vmatprep.subr.mxu0 0.0
    %583 = vmatpush1.msra.mxu0 0.0
    %584 = vmatprep.subr.mxu0 0.0
    %585 = vmatpush1.msra.mxu0 0.0
    %586 = vmatprep.subr.mxu0 0.0
    %587 = vmatpush1.msra.mxu0 0.0
    %588 = vmatprep.subr.mxu0 0.0
    %589 = vmatpush1.msra.mxu0 0.0
    %590 = vmatprep.subr.mxu0 0.0
    %591 = vmatpush1.msra.mxu0 0.0
    %592 = vmatprep.subr.mxu0 0.0
    %593 = vmatpush1.msra.mxu0 0.0
    %594 = vmatprep.subr.mxu0 0.0
    %595 = vmatpush1.msra.mxu0 0.0
    %596 = vmatprep.subr.mxu0 0.0
    %597 = vmatpush1.msra.mxu0 0.0
    %598 = vmatprep.subr.mxu0 0.0
    %599 = vmatpush1.msra.mxu0 0.0
    %600 = vmatprep.subr.mxu0 0.0
    %601 = vmatpush1.msra.mxu0 0.0
    %602 = vmatprep.subr.mxu0 0.0
    %603 = vmatpush1.msra.mxu0 0.0
    %604 = vmatprep.subr.mxu0 0.0
    %605 = vmatpush1.msra.mxu0 0.0
    %606 = vmatprep.subr.mxu0 0.0
    %607 = vmatpush1.msra.mxu0 0.0
    %608 = vmatprep.subr.mxu0 0.0
    %609 = vmatpush1.msra.mxu0 0.0
    %610 = vmatprep.subr.mxu0 0.0
    %611 = vmatpush1.msra.mxu0 0.0
    %612 = vmatprep.subr.mxu0 0.0
    %613 = vmatpush1.msra.mxu0 0.0
    %614 = vmatprep.subr.mxu0 0.0
    %615 = vmatpush1.msra.mxu0 0.0
    %616 = vmatprep.subr.mxu0 0.0
    %617 = vmatpush1.msra.mxu0 0.0
    %618 = vmatprep.subr.mxu0 0.0
    %619 = vmatpush1.msra.mxu0 0.0
    %620 = vmatprep.subr.mxu0 0.0
    %621 = vmatpush1.msra.mxu0 0.0
    %622 = vmatprep.mubr.f32.mxu0 0.0
    %623 = vmatmul.mubr.f32.gmra.mrb[0].mxu0 %v556
    %v624 = vpop.f32.mrb[0].mxu0
    %v625 = vadd.f32 0.0, %v624
    %v626 = vpop.f32.mrb[0].mxu0
    %627 = vdwg.mxu0
    %v628 = vld [vmem:[%s3] sm:$0x1]
    %v630 = vlaneseq
    %v631 = vshrl.u32 %v630, 7
    %v632 = vsub.s32 0, %v631
    %v633 = vrot.slane %v628, %v632
    %v635 = vmul.f32 %v552, %v633
    %v636 = vmul.f32 %v625, %v633
    %vm637 = vcmask 125952
    %638 = vst.msk [vmem:[#allocation2] sm:$0xf] %vm637, %v635
    %639 = vst.msk [vmem:[#allocation2 + $0x4] sm:$0xf] %vm637, %v636
    // Predicated region
    $region22: #{tpu_custom_call.1} parent=1 // pred_check
      _
    $region23: #{tpu_custom_call.1} parent=1 // pred_check_branch
      %641 = sbr.rel (0) target = $region25
    $region24: #{tpu_custom_call.1} parent=1 // pred_region
      %s643 = ssub.s32 128, 128
      %644 = vsyncadd [#allocation3], %s643
      %s645 = sshll.u32 [#allocation2], 4
      %s646 = int_to_ptr.vmem [resolvable:$true] %s645
      %651 = dma.vmem_to_hbm [thread:$0]  %s646, 128, %s5, [#allocation3], 64, 64, 4
    $region25: #{tpu_custom_call.1} parent=1 // pred_fallthru
      _
    // Predicated region
    $region26: #{tpu_custom_call.1} parent=1 // pred_check
      _
    $region27: #{tpu_custom_call.1} parent=1 // pred_check_branch
      %653 = sbr.rel (0) target = $region29
    $region28: #{tpu_custom_call.1} parent=1 // pred_region
      %654 = dma.done [#allocation3], 128
    $region29: #{tpu_custom_call.1} parent=1 // pred_fallthru
      _
    %655 = vsyncpa [#allocation3], 1

</llo_original>
